<compile_context>
chip_gen: v5e
topology: v5e:2x2
jax: 0.10.0
libtpu: 0.0.40
codegen_flags: <defaults>
</compile_context>

<pallas_src>
import jax
import jax.numpy as jnp
from jax.experimental import pallas as pl
from jax.experimental.pallas import tpu as pltpu

# ---------------- deterministic synthetic config ----------------
SAMPLE_RATE = 16000
N_FFT = 256
WIN_LENGTH_MS = 16          # -> win_length = 256
HOP_LENGTH_MS = 8           # -> hop_length = 128
N_MELS = 64
NORMALIZE = True
MEAN = -5.0
STD = 4.0

WIN_LENGTH = int(SAMPLE_RATE * WIN_LENGTH_MS) // 1000   # 256
HOP_LENGTH = int(SAMPLE_RATE * HOP_LENGTH_MS) // 1000   # 128

N_FREQ = N_FFT // 2 + 1       # 129 one-sided bins (reference definition)
N_FREQ_K = N_FFT // 2         # 128 bins used in-kernel (Nyquist fb row == 0 for f_max=sr/2)
N_MELS_PAD = 128              # lane-dense output width (sliced back to 64 in wrapper)
TM = 128                      # frame rows per grid step

INV_STD = 1.0 / STD
NORM_BIAS = -MEAN / STD

assert N_FFT == 2 * HOP_LENGTH, "in-kernel framing assumes n_fft == 2 * hop_length"
assert WIN_LENGTH == N_FFT


# ---------------- parameter construction (glue) ----------------
def _hann_window(n):
    # torch.hann_window default (periodic=True)
    k = jnp.arange(n, dtype=jnp.float32)
    return 0.5 - 0.5 * jnp.cos(2.0 * jnp.pi * k / n)


def _dft_weight(n_fft, win_length):
    """Combined windowed one-sided real-DFT basis: (n_fft, 2*N_FREQ_K) = [cos | -sin]."""
    win = _hann_window(win_length)
    if win_length < n_fft:  # torch.stft centers the window inside n_fft
        pad_l = (n_fft - win_length) // 2
        win = jnp.pad(win, (pad_l, n_fft - win_length - pad_l))
    n = jnp.arange(n_fft, dtype=jnp.float32)[:, None]
    k = jnp.arange(N_FREQ_K, dtype=jnp.float32)[None, :]       # Nyquist bin dropped
    ang = 2.0 * jnp.pi * n * k / n_fft
    w_re = win[:, None] * jnp.cos(ang)
    w_im = -win[:, None] * jnp.sin(ang)
    return jnp.concatenate([w_re, w_im], axis=1).astype(jnp.float32)   # (256, 256)


def _mel_fbanks(n_freqs, f_min, f_max, n_mels, sample_rate):
    """torchaudio.functional.melscale_fbanks, htk scale, norm=None: (n_freqs, n_mels)."""
    all_freqs = jnp.linspace(0.0, float(sample_rate // 2), n_freqs)

    def hz_to_mel(f):
        return 2595.0 * jnp.log10(1.0 + f / 700.0)

    def mel_to_hz(m):
        return 700.0 * (10.0 ** (m / 2595.0) - 1.0)

    m_min = hz_to_mel(jnp.float32(f_min))
    m_max = hz_to_mel(jnp.float32(f_max))
    m_pts = jnp.linspace(m_min, m_max, n_mels + 2)
    f_pts = mel_to_hz(m_pts)
    f_diff = f_pts[1:] - f_pts[:-1]                      # (n_mels + 1,)
    slopes = f_pts[None, :] - all_freqs[:, None]         # (n_freqs, n_mels + 2)
    down = -slopes[:, :-2] / f_diff[:-1]
    up = slopes[:, 2:] / f_diff[1:]
    fb = jnp.maximum(0.0, jnp.minimum(down, up))
    return fb.astype(jnp.float32)


# ---------------- Pallas kernel (hot path) ----------------
def _logmel_kernel(xp_ref, w_ref, fb_ref, o_ref):
    # xp_ref : (n_chunks, HOP)       per-batch waveform in hop-sized chunks (resident)
    # w_ref  : (N_FFT, 2*N_FREQ_K)   combined windowed DFT basis [cos | -sin]
    # fb_ref : (N_FREQ_K, N_MELS_PAD) mel filterbank (zero-padded columns)
    # o_ref  : (TM, N_MELS_PAD)
    base = pl.multiple_of(pl.program_id(1) * TM, TM)
    # frame r of this tile = [chunk base+r | chunk base+r+1]   (hop == n_fft/2)
    a = xp_ref[pl.ds(base, TM), :]          # first halves  (TM, HOP)
    b = xp_ref[pl.ds(base + 1, TM), :]      # second halves (TM, HOP)
    # [a | b] @ W  ==  a @ W[:HOP] + b @ W[HOP:]   -> (TM, 2*N_FREQ_K)
    dft = (jnp.dot(a, w_ref[:HOP_LENGTH, :], preferred_element_type=jnp.float32)
           + jnp.dot(b, w_ref[HOP_LENGTH:, :], preferred_element_type=jnp.float32))
    re = dft[:, :N_FREQ_K]
    im = dft[:, N_FREQ_K:]
    power = re * re + im * im                                               # Spectrogram (power=2)
    mel = jnp.dot(power, fb_ref[...], preferred_element_type=jnp.float32)   # MelScale
    logmel = jnp.log(mel + 1e-9)
    if NORMALIZE:
        logmel = logmel * INV_STD + NORM_BIAS                               # (x - mean) / std
    o_ref[...] = logmel.astype(o_ref.dtype)


def audio_preprocessing(x, x_len):
    """x: (B, L) float32 waveform; x_len: (B,) int32 or None.
    Returns (mel, new_len) with mel of shape (B, n_mels, T) like the torch module."""
    B, L = x.shape
    pad = N_FFT // 2
    # center=True reflect padding (torch.stft default)
    xp = jnp.pad(x, ((0, 0), (pad, pad)), mode="reflect").astype(jnp.float32)

    T = L // HOP_LENGTH + 1
    T_pad = ((T + TM - 1) // TM) * TM
    n_chunks = T_pad + 1                     # frame t uses chunks t and t+1
    needed = n_chunks * HOP_LENGTH
    cur = xp.shape[1]
    if needed > cur:
        xp = jnp.pad(xp, ((0, 0), (0, needed - cur)))
    else:
        xp = xp[:, :needed]                  # samples past the last frame window are unused
    xp2d = xp.reshape(B, n_chunks, HOP_LENGTH)

    w_cat = _dft_weight(N_FFT, WIN_LENGTH)                              # (256, 256)
    fb = _mel_fbanks(N_FREQ, 0.0, 8000.0, N_MELS, SAMPLE_RATE)          # (129, 64)
    fb = jnp.pad(fb[:N_FREQ_K, :], ((0, 0), (0, N_MELS_PAD - N_MELS)))  # (128, 128)

    out = pl.pallas_call(
        _logmel_kernel,
        out_shape=jax.ShapeDtypeStruct((B, T_pad, N_MELS_PAD), jnp.float32),
        grid_spec=pltpu.PrefetchScalarGridSpec(
            num_scalar_prefetch=0,
            grid=(B, T_pad // TM),
            in_specs=[
                # per-batch waveform chunks, resident across the frame-tile axis
                pl.BlockSpec((None, n_chunks, HOP_LENGTH), lambda b, t: (b, 0, 0)),
                pl.BlockSpec((N_FFT, 2 * N_FREQ_K), lambda b, t: (0, 0)),   # DFT basis (resident)
                pl.BlockSpec((N_FREQ_K, N_MELS_PAD), lambda b, t: (0, 0)),  # mel fbank (resident)
            ],
            out_specs=pl.BlockSpec((None, TM, N_MELS_PAD), lambda b, t: (b, t, 0)),
        ),
        compiler_params=pltpu.CompilerParams(
            dimension_semantics=("parallel", "arbitrary")),
    )(xp2d, w_cat, fb)

    mel = out[:, :T, :N_MELS].transpose(0, 2, 1)   # (B, n_mels, T)
    new_len = None if x_len is None else x_len // HOP_LENGTH + 1
    return mel, new_len


if __name__ == "__main__":
    key = jax.random.PRNGKey(0)
    B, L = 2, 2048
    x = jax.random.normal(key, (B, L), dtype=jnp.float32)
    x_len = jnp.array([L, L - 512], dtype=jnp.int32)

    mel, new_len = audio_preprocessing(x, x_len)
    jax.block_until_ready((mel, new_len))

    T = L // HOP_LENGTH + 1
    assert mel.shape == (B, N_MELS, T), mel.shape
    assert mel.dtype == jnp.float32
    assert bool(jnp.all(jnp.isfinite(mel)))

    # Loose numerical check against a pure-JAX (full 129-bin) reference.
    def _reference(xw):
        xr = jnp.pad(xw, ((0, 0), (N_FFT // 2, N_FFT // 2)), mode="reflect")
        idx = (jnp.arange(T) * HOP_LENGTH)[:, None] + jnp.arange(N_FFT)[None, :]
        frames = xr[:, idx].astype(jnp.float32)                    # (B, T, n_fft)
        win = _hann_window(N_FFT)
        n = jnp.arange(N_FFT, dtype=jnp.float32)[:, None]
        k = jnp.arange(N_FREQ, dtype=jnp.float32)[None, :]
        ang = 2.0 * jnp.pi * n * k / N_FFT
        wre = win[:, None] * jnp.cos(ang)
        wim = -win[:, None] * jnp.sin(ang)
        hp = jax.lax.Precision.HIGHEST
        re = jnp.einsum("btn,nk->btk", frames, wre, precision=hp)
        im = jnp.einsum("btn,nk->btk", frames, wim, precision=hp)
        power = re * re + im * im
        fb_full = _mel_fbanks(N_FREQ, 0.0, 8000.0, N_MELS, SAMPLE_RATE)
        melr = jnp.einsum("btk,km->btm", power, fb_full, precision=hp)
        lg = jnp.log(melr + 1e-9)
        if NORMALIZE:
            lg = (lg - MEAN) / STD
        return lg.transpose(0, 2, 1)

    ref = _reference(x)
    err = float(jnp.max(jnp.abs(mel - ref)))
    assert err < 2e-2, f"max abs diff vs reference = {err}"

    print("KERNEL_OK")
</pallas_src>

<mosaic_0001>
module attributes {stable_mosaic.version = 11 : i64} {
  func.func @_logmel_kernel(%arg0: i32, %arg1: i32, %arg2: memref<1x129x128xf32, #tpu.memory_space<vmem>>, %arg3: memref<256x256xf32, #tpu.memory_space<vmem>>, %arg4: memref<128x128xf32, #tpu.memory_space<vmem>>, %arg5: memref<1x128x128xf32, #tpu.memory_space<vmem>>) attributes {dimension_semantics = [#tpu.dimension_semantics<parallel>, #tpu.dimension_semantics<arbitrary>], iteration_bounds = array<i64: 2, 1>, scalar_prefetch = 0 : i64, scratch_operands = 0 : i64, tpu.core_type = #tpu.core_type<tc>, window_params = [{transform_indices = @transform_0, window_bounds = array<i64: 1, 129, 128>}, {pipeline_mode = #tpu.pipeline_mode<synchronous>, transform_indices = @transform_1, window_bounds = array<i64: 256, 256>}, {pipeline_mode = #tpu.pipeline_mode<synchronous>, transform_indices = @transform_2, window_bounds = array<i64: 128, 128>}, {transform_indices = @transform_3, window_bounds = array<i64: 1, 128, 128>}]} {
    %c128_i32 = arith.constant 128 : i32
    %0 = arith.muli %arg1, %c128_i32 : i32
    %1 = tpu.assume_multiple %0, 128 : i32
    %c0 = arith.constant 0 : index
    %2 = arith.index_cast %1 : i32 to index
    %c0_0 = arith.constant 0 : index
    %3 = vector.load %arg2[%c0, %2, %c0_0] : memref<1x129x128xf32, #tpu.memory_space<vmem>>, vector<1x128x128xf32>
    %4 = vector.shape_cast %3 : vector<1x128x128xf32> to vector<128x128xf32>
    %c1_i32 = arith.constant 1 : i32
    %5 = arith.addi %1, %c1_i32 : i32
    %c0_1 = arith.constant 0 : index
    %6 = arith.index_cast %5 : i32 to index
    %c0_2 = arith.constant 0 : index
    %7 = vector.load %arg2[%c0_1, %6, %c0_2] : memref<1x129x128xf32, #tpu.memory_space<vmem>>, vector<1x128x128xf32>
    %8 = vector.shape_cast %7 : vector<1x128x128xf32> to vector<128x128xf32>
    %c0_3 = arith.constant 0 : index
    %c0_4 = arith.constant 0 : index
    %9 = vector.load %arg3[%c0_3, %c0_4] : memref<256x256xf32, #tpu.memory_space<vmem>>, vector<128x256xf32>
    %cst = arith.constant dense<0.000000e+00> : vector<128x256xf32>
    %10 = tpu.matmul %4, %9, %cst {dimension_numbers = #tpu.dot_dimension_numbers<[1], [0], [0], [1], [0, 0, 1, 1], [], []>} : vector<128x128xf32>, vector<128x256xf32>, vector<128x256xf32> -> vector<128x256xf32>
    %c128 = arith.constant 128 : index
    %c0_5 = arith.constant 0 : index
    %11 = vector.load %arg3[%c128, %c0_5] : memref<256x256xf32, #tpu.memory_space<vmem>>, vector<128x256xf32>
    %cst_6 = arith.constant dense<0.000000e+00> : vector<128x256xf32>
    %12 = tpu.matmul %8, %11, %cst_6 {dimension_numbers = #tpu.dot_dimension_numbers<[1], [0], [0], [1], [0, 0, 1, 1], [], []>} : vector<128x128xf32>, vector<128x256xf32>, vector<128x256xf32> -> vector<128x256xf32>
    %13 = arith.addf %10, %12 : vector<128x256xf32>
    %14 = vector.extract_strided_slice %13 {offsets = [0, 0], sizes = [128, 128], strides = [1, 1]} : vector<128x256xf32> to vector<128x128xf32>
    %15 = vector.extract_strided_slice %13 {offsets = [0, 128], sizes = [128, 128], strides = [1, 1]} : vector<128x256xf32> to vector<128x128xf32>
    %16 = arith.mulf %14, %14 : vector<128x128xf32>
    %17 = arith.mulf %15, %15 : vector<128x128xf32>
    %18 = arith.addf %16, %17 : vector<128x128xf32>
    %c0_7 = arith.constant 0 : index
    %c0_8 = arith.constant 0 : index
    %19 = vector.load %arg4[%c0_7, %c0_8] : memref<128x128xf32, #tpu.memory_space<vmem>>, vector<128x128xf32>
    %cst_9 = arith.constant dense<0.000000e+00> : vector<128x128xf32>
    %20 = tpu.matmul %18, %19, %cst_9 {dimension_numbers = #tpu.dot_dimension_numbers<[1], [0], [0], [1], [0, 0, 1, 1], [], []>} : vector<128x128xf32>, vector<128x128xf32>, vector<128x128xf32> -> vector<128x128xf32>
    %cst_10 = arith.constant 9.99999971E-10 : f32
    %21 = vector.broadcast %cst_10 : f32 to vector<128x128xf32>
    %22 = arith.addf %20, %21 : vector<128x128xf32>
    %23 = math.log %22 : vector<128x128xf32>
    %cst_11 = arith.constant 2.500000e-01 : f32
    %24 = vector.broadcast %cst_11 : f32 to vector<128x128xf32>
    %25 = arith.mulf %23, %24 : vector<128x128xf32>
    %cst_12 = arith.constant 1.250000e+00 : f32
    %26 = vector.broadcast %cst_12 : f32 to vector<128x128xf32>
    %27 = arith.addf %25, %26 : vector<128x128xf32>
    %c0_13 = arith.constant 0 : index
    %c0_14 = arith.constant 0 : index
    %c0_15 = arith.constant 0 : index
    %28 = vector.load %arg5[%c0_13, %c0_14, %c0_15] : memref<1x128x128xf32, #tpu.memory_space<vmem>>, vector<1x128x128xf32>
    %29 = vector.shape_cast %28 : vector<1x128x128xf32> to vector<128x128xf32>
    %30 = vector.shape_cast %27 : vector<128x128xf32> to vector<1x128x128xf32>
    tpu.vector_store %arg5[%c0_13, %c0_14, %c0_15], %30 {strides = array<i32>} : memref<1x128x128xf32, #tpu.memory_space<vmem>>, vector<1x128x128xf32>,
    return
  }
  func.func @transform_0(%arg0: i32, %arg1: i32) -> (i32, i32, i32) {
    %c0_i32 = arith.constant 0 : i32
    %c0_i32_0 = arith.constant 0 : i32
    %c0_i32_1 = arith.constant 0 : i32
    return %arg0, %c0_i32, %c0_i32_0 : i32, i32, i32
  }
  func.func @transform_1(%arg0: i32, %arg1: i32) -> (i32, i32) {
    %c0_i32 = arith.constant 0 : i32
    %c0_i32_0 = arith.constant 0 : i32
    %c0_i32_1 = arith.constant 0 : i32
    return %c0_i32, %c0_i32_0 : i32, i32
  }
  func.func @transform_2(%arg0: i32, %arg1: i32) -> (i32, i32) {
    %c0_i32 = arith.constant 0 : i32
    %c0_i32_0 = arith.constant 0 : i32
    %c0_i32_1 = arith.constant 0 : i32
    return %c0_i32, %c0_i32_0 : i32, i32
  }
  func.func @transform_3(%arg0: i32, %arg1: i32) -> (i32, i32, i32) {
    %c0_i32 = arith.constant 0 : i32
    %c0_i32_0 = arith.constant 0 : i32
    return %arg0, %arg1, %c0_i32 : i32, i32, i32
  }
}

</mosaic_0001>

<llo_original>
// kernel: tpu_custom_call.1
$region0: #{tpu_custom_call.1}
  #allocation0 [shape = 'u32[]', space=smem, size = 0x4, offset = 0x4, fixed_abs, tag = 'smem constant byte address 0x4 - core index']
  #allocation1 [shape = 'u32[72,128]{1,0:T(1,128)}', space=vmem, size = 0x9000, scoped, tag = 'internal scratch']
  %s0 = inlined_call_operand.vmem [shape: f32[2,129,128], index: 0, kind: input, shape index: {}]
  %s1 = inlined_call_operand.vmem [shape: f32[256,256], index: 1, kind: input, shape index: {}]
  %s2 = inlined_call_operand.hbm [shape: f32[128,128], index: 2, kind: input, shape index: {}]
  %s3 = inlined_call_operand.hbm [shape: f32[2,128,128], index: 3, kind: output, shape index: {}]
  %s4 = sld [smem:[#allocation0]]
  $region49: #{tpu_custom_call.1} parent=0
    _
  %s6 = ssub.s32 1, %s4
  %s7 = scalar_select 0, %s6, %s4
  $region1: #{tpu_custom_call.1} parent=0
    #allocation2 [shape = 'u8[65536]{0}', space=vmem, size = 0x10000, scoped, tag = 'input window, operand 2, single buffered']
    #allocation3 [shape = 's32[2]{0}', space=sflag, size = 0x8, scoped, tag = 'scoped memory for tpu_custom_call.1']
    #allocation4 [shape = 's32[2]{0}', space=sflag, size = 0x8, scoped, tag = 'scoped memory for tpu_custom_call.1']
    #allocation5 [shape = 'u8[131072]{0}', space=vmem, size = 0x20000, scoped, tag = 'output window, operand 0']
    %8 = vsyncpa [#allocation3], 0
    %9 = vsyncpa [#allocation4], 0
    %s10 = scalar_lea.sflag [#allocation4], 1
    %11 = vsyncpa %s10, 0
    loop: start=0, step=1, limit=4
    $region2: #{tpu_custom_call.1} parent=1 // loop_pre_header
      _
    $region3: #{tpu_custom_call.1} parent=1 // loop_header
      %s13 = sphi 0, %s17
      %p14 = scmp.ge.s32.totalorder %s13, 4
      %s20 = sphi 0, %s32
      %s21 = sphi 0, %s28
      %s22 = sphi 0, %s20
      %s23 = sphi 0, %s21
      %s24 = sphi 0, %s22
      %s25 = sphi 0, %s23
      %s35 = sphi 0, %s37
      %s38 = sphi 0, %s35
      %s39 = sphi 0, %s38
      %s55 = sphi 0, %s39
      %s59 = sphi 0, %s59
      %s61 = sphi 0, %s59
      %s62 = sphi 0, %s61
      %s76 = sphi 0, %s62
      %s80 = sphi 0, %s80
      %s82 = sphi 0, %s80
      %s83 = sphi 0, %s82
      %s97 = sphi 0, %s83
      %s105 = sphi 0, %s107
      %s108 = sphi 0, %s105
      %s109 = sphi 0, %s108
      %s125 = sphi 0, %s109
    $region4: #{tpu_custom_call.1} parent=1 // loop_header_branch
      %16 = sbr.rel (%p14) target = $region8
    $region5: #{tpu_custom_call.1} parent=1 // loop_body
      %s18 = ssub.s32 %s13, 1
      %s19 = ssub.s32 %s13, 2
      %s26 = sadd.s32 1, %s21
      %p27 = scmp.ge.s32.totalorder %s26, 1
      %s28 = scalar_select %p27, 0, %s26
      %s29 = sadd.s32 1, %s20
      %s30 = scalar_select %p27, %s29, %s20
      %p31 = scmp.ge.s32.totalorder %s30, 2
      %s32 = scalar_select %p31, 0, %s30
      %s33 = ssub.s32 %s20, %s32
      %p34 = scmp.eq.s32.totalorder %s33, 0
      %s36 = sadd.s32 %s35, 1
      %s37 = scalar_select %p34, %s35, %s36
      %p40 = pneg %p34
      %p41 = scmp.eq.s32.totalorder %s13, 1
      %p42 = por %p40, %p41
      %p43 = scmp.ne.s32.totalorder %s35, %s38
      %p44 = scmp.eq.s32.totalorder %s13, 0
      %p45 = por %p43, %p44
      %p46 = scmp.ne.s32.totalorder %s35, %s38
      %p47 = scmp.eq.s32.totalorder %s18, 1
      %p48 = por %p46, %p47
      %p49 = scmp.ne.s32.totalorder %s38, %s39
      %p50 = scmp.eq.s32.totalorder %s18, 0
      %p51 = por %p49, %p50
      %p52 = scmp.ne.s32.totalorder %s38, %s39
      %p53 = scmp.eq.s32.totalorder %s19, 1
      %p54 = por %p52, %p53
      %p56 = scmp.ne.s32.totalorder %s39, %s55
      %p57 = scmp.eq.s32.totalorder %s19, 0
      %p58 = por %p56, %p57
      %s60 = sadd.s32 %s59, 1
      %p63 = scmp.eq.s32.totalorder %s13, 1
      %p64 = scmp.ne.s32.totalorder %s59, %s61
      %p65 = scmp.eq.s32.totalorder %s13, 0
      %p66 = por %p64, %p65
      %p67 = scmp.ne.s32.totalorder %s59, %s61
      %p68 = scmp.eq.s32.totalorder %s18, 1
      %p69 = por %p67, %p68
      %p70 = scmp.ne.s32.totalorder %s61, %s62
      %p71 = scmp.eq.s32.totalorder %s18, 0
      %p72 = por %p70, %p71
      %p73 = scmp.ne.s32.totalorder %s61, %s62
      %p74 = scmp.eq.s32.totalorder %s19, 1
      %p75 = por %p73, %p74
      %p77 = scmp.ne.s32.totalorder %s62, %s76
      %p78 = scmp.eq.s32.totalorder %s19, 0
      %p79 = por %p77, %p78
      %s81 = sadd.s32 %s80, 1
      %p84 = scmp.eq.s32.totalorder %s13, 1
      %p85 = scmp.ne.s32.totalorder %s80, %s82
      %p86 = scmp.eq.s32.totalorder %s13, 0
      %p87 = por %p85, %p86
      %p88 = scmp.ne.s32.totalorder %s80, %s82
      %p89 = scmp.eq.s32.totalorder %s18, 1
      %p90 = por %p88, %p89
      %p91 = scmp.ne.s32.totalorder %s82, %s83
      %p92 = scmp.eq.s32.totalorder %s18, 0
      %p93 = por %p91, %p92
      %p94 = scmp.ne.s32.totalorder %s82, %s83
      %p95 = scmp.eq.s32.totalorder %s19, 1
      %p96 = por %p94, %p95
      %p98 = scmp.ne.s32.totalorder %s83, %s97
      %p99 = scmp.eq.s32.totalorder %s19, 0
      %p100 = por %p98, %p99
      %s101 = ssub.s32 %s20, %s32
      %s102 = ssub.s32 %s21, %s28
      %s103 = sor.u32 %s101, %s102
      %p104 = scmp.eq.s32.totalorder %s103, 0
      %s106 = sadd.s32 %s105, 1
      %s107 = scalar_select %p104, %s105, %s106
      %p110 = pneg %p104
      %p111 = scmp.eq.s32.totalorder %s13, 1
      %p112 = por %p110, %p111
      %p113 = scmp.ne.s32.totalorder %s105, %s108
      %p114 = scmp.eq.s32.totalorder %s13, 0
      %p115 = por %p113, %p114
      %p116 = scmp.ne.s32.totalorder %s105, %s108
      %p117 = scmp.eq.s32.totalorder %s18, 1
      %p118 = por %p116, %p117
      %p119 = scmp.ne.s32.totalorder %s108, %s109
      %p120 = scmp.eq.s32.totalorder %s18, 0
      %p121 = por %p119, %p120
      %p122 = scmp.ne.s32.totalorder %s108, %s109
      %p123 = scmp.eq.s32.totalorder %s19, 1
      %p124 = por %p122, %p123
      %p126 = scmp.ne.s32.totalorder %s109, %s125
      %p127 = scmp.eq.s32.totalorder %s19, 0
      %p128 = por %p126, %p127
      %p129 = scmp.le.s32.totalorder 1, %s13
      %p130 = scmp.lt.s32.totalorder %s13, 3
      %p131 = pnand %p129, %p130
      %p132 = pneg %p131
      // Predicated region
      $region9: #{tpu_custom_call.1} parent=5 // pred_check
        _
      $region10: #{tpu_custom_call.1} parent=5 // pred_check_branch
        %134 = sbr.rel (%p131) target = $region12
      $region11: #{tpu_custom_call.1} parent=5 // pred_region
        %s135 = ssub.s32 %s13, 1
        // Predicated region
        $region13: #{tpu_custom_call.1} parent=11 // pred_check
          %p136 = pneg %p72
        $region14: #{tpu_custom_call.1} parent=11 // pred_check_branch
          %138 = sbr.rel (%p136) target = $region16
        $region15: #{tpu_custom_call.1} parent=11 // pred_region
          _
        $region16: #{tpu_custom_call.1} parent=11 // pred_fallthru
          _
        // Predicated region
        $region17: #{tpu_custom_call.1} parent=11 // pred_check
          %p139 = pneg %p93
        $region18: #{tpu_custom_call.1} parent=11 // pred_check_branch
          %141 = sbr.rel (%p139) target = $region20
        $region19: #{tpu_custom_call.1} parent=11 // pred_region
          %143 = vsyncadd [#allocation3], 0
          %s144 = sshll.u32 %s2, 4
          %s145 = int_to_ptr.hbm [resolvable:$true] %s144
          %s146 = sshll.u32 [#allocation2], 4
          %s147 = int_to_ptr.vmem [resolvable:$true] %s146
          %152 = dma.hbm_to_vmem [thread:$0]  %s145, 2048, %s147, [#allocation3], 128, 128, 8
        $region20: #{tpu_custom_call.1} parent=11 // pred_fallthru
          _
      $region12: #{tpu_custom_call.1} parent=5 // pred_fallthru
        _
      %p153 = scmp.lt.s32.totalorder %s13, 2
      // Predicated region
      $region21: #{tpu_custom_call.1} parent=5 // pred_check
        %p154 = pneg %p153
      $region22: #{tpu_custom_call.1} parent=5 // pred_check_branch
        %156 = sbr.rel (%p154) target = $region24
      $region23: #{tpu_custom_call.1} parent=5 // pred_region
        // Predicated region
        $region25: #{tpu_custom_call.1} parent=23 // pred_check
          %p157 = pneg %p45
        $region26: #{tpu_custom_call.1} parent=23 // pred_check_branch
          %159 = sbr.rel (%p157) target = $region28
        $region27: #{tpu_custom_call.1} parent=23 // pred_region
          %p160 = scmp.lt.s32.totalorder %s20, 1
          %s161 = scalar_select %p160, %s20, 1
          %s162 = smul.addr %s161, 17
          %s163 = smul.addr %s162, 8
          %s164 = scalar_lea.vmem %s0, %s163
        $region28: #{tpu_custom_call.1} parent=23 // pred_fallthru
          _
      $region24: #{tpu_custom_call.1} parent=5 // pred_fallthru
        _
      %p165 = scmp.le.s32.totalorder 1, %s13
      %p166 = scmp.lt.s32.totalorder %s13, 3
      %p167 = pnand %p165, %p166
      %p168 = pneg %p167
      // Predicated region
      $region29: #{tpu_custom_call.1} parent=5 // pred_check
        _
      $region30: #{tpu_custom_call.1} parent=5 // pred_check_branch
        %170 = sbr.rel (%p167) target = $region32
      $region31: #{tpu_custom_call.1} parent=5 // pred_region
        %s171 = ssub.s32 %s13, 1
        // Predicated region
        $region33: #{tpu_custom_call.1} parent=31 // pred_check
          %p172 = pneg %p93
        $region34: #{tpu_custom_call.1} parent=31 // pred_check_branch
          %174 = sbr.rel (%p172) target = $region36
        $region35: #{tpu_custom_call.1} parent=31 // pred_region
          %176 = dma.done [#allocation3], 2048
        $region36: #{tpu_custom_call.1} parent=31 // pred_fallthru
          _
        %p177 = scmp.lt.s32.totalorder %s22, 1
        %s178 = scalar_select %p177, %s22, 1
        %s179 = smul.addr %s178, 17
        %s180 = smul.addr %s179, 8
        %s181 = scalar_lea.vmem %s0, %s180
        %p182 = pneg %p51
        %p183 = pneg %p48
        %p184 = pneg %p72
        %p185 = pneg %p69
        %p186 = pneg %p93
        %p187 = pneg %p90
        %p188 = pneg %p121
        %p189 = pneg %p118
        %s190 = sand.u32 %s108, 1
        %s191 = scalar_lea.sflag [#allocation4], %s190
        %s192 = sand.u32 %s108, 1
        %s193 = smul.addr %s192, 128
        %s194 = scalar_lea.vmem [#allocation5], %s193
        %p195 = scmp.lt.s32.totalorder %s22, 1
        %s196 = scalar_select %p195, %s22, 1
        %s197 = smul.addr %s196, 17
        %s198 = smul.addr %s197, 8
        %s199 = scalar_lea.vmem %s0, %s198
        %s200 = smul.u32 16, %s23
        %s201 = smul.u32 %s23, 128
        %s202 = scalar_lea.vmem %s199, %s201
        %v203 = vld [vmem:[%s202] sm:$0xff]
        %v204 = vld [vmem:[%s202 + $0x8] sm:$0xff]
        %v205 = vld [vmem:[%s202 + $0x10] sm:$0xff]
        %v206 = vld [vmem:[%s202 + $0x18] sm:$0xff]
        %v207 = vld [vmem:[%s202 + $0x20] sm:$0xff]
        %v208 = vld [vmem:[%s202 + $0x28] sm:$0xff]
        %v209 = vld [vmem:[%s202 + $0x30] sm:$0xff]
        %v210 = vld [vmem:[%s202 + $0x38] sm:$0xff]
        %v211 = vld [vmem:[%s202 + $0x40] sm:$0xff]
        %v212 = vld [vmem:[%s202 + $0x48] sm:$0xff]
        %v213 = vld [vmem:[%s202 + $0x50] sm:$0xff]
        %v214 = vld [vmem:[%s202 + $0x58] sm:$0xff]
        %v215 = vld [vmem:[%s202 + $0x60] sm:$0xff]
        %v216 = vld [vmem:[%s202 + $0x68] sm:$0xff]
        %v217 = vld [vmem:[%s202 + $0x70] sm:$0xff]
        %v218 = vld [vmem:[%s202 + $0x78] sm:$0xff]
        %s219 = sadd.s32 %s201, 1
        %s220 = scalar_lea.vmem %s199, %s219
        %v221 = vld [vmem:[%s220] sm:$0xff]
        %v222 = vld [vmem:[%s220 + $0x8] sm:$0xff]
        %v223 = vld [vmem:[%s220 + $0x10] sm:$0xff]
        %v224 = vld [vmem:[%s220 + $0x18] sm:$0xff]
        %v225 = vld [vmem:[%s220 + $0x20] sm:$0xff]
        %v226 = vld [vmem:[%s220 + $0x28] sm:$0xff]
        %v227 = vld [vmem:[%s220 + $0x30] sm:$0xff]
        %v228 = vld [vmem:[%s220 + $0x38] sm:$0xff]
        %v229 = vld [vmem:[%s220 + $0x40] sm:$0xff]
        %v230 = vld [vmem:[%s220 + $0x48] sm:$0xff]
        %v231 = vld [vmem:[%s220 + $0x50] sm:$0xff]
        %v232 = vld [vmem:[%s220 + $0x58] sm:$0xff]
        %v233 = vld [vmem:[%s220 + $0x60] sm:$0xff]
        %v234 = vld [vmem:[%s220 + $0x68] sm:$0xff]
        %v235 = vld [vmem:[%s220 + $0x70] sm:$0xff]
        %v236 = vld [vmem:[%s220 + $0x78] sm:$0xff]
        %v237 = vld [vmem:[%s1] sm:$0xff]
        %v238 = vld [vmem:[%s1 + $0x8] sm:$0xff]
        %v239 = vld [vmem:[%s1 + $0x10] sm:$0xff]
        %v240 = vld [vmem:[%s1 + $0x18] sm:$0xff]
        %v241 = vld [vmem:[%s1 + $0x20] sm:$0xff]
        %v242 = vld [vmem:[%s1 + $0x28] sm:$0xff]
        %v243 = vld [vmem:[%s1 + $0x30] sm:$0xff]
        %v244 = vld [vmem:[%s1 + $0x38] sm:$0xff]
        %v245 = vld [vmem:[%s1 + $0x40] sm:$0xff]
        %v246 = vld [vmem:[%s1 + $0x48] sm:$0xff]
        %v247 = vld [vmem:[%s1 + $0x50] sm:$0xff]
        %v248 = vld [vmem:[%s1 + $0x58] sm:$0xff]
        %v249 = vld [vmem:[%s1 + $0x60] sm:$0xff]
        %v250 = vld [vmem:[%s1 + $0x68] sm:$0xff]
        %v251 = vld [vmem:[%s1 + $0x70] sm:$0xff]
        %v252 = vld [vmem:[%s1 + $0x78] sm:$0xff]
        %v253 = vld [vmem:[%s1 + $0x80] sm:$0xff]
        %v254 = vld [vmem:[%s1 + $0x88] sm:$0xff]
        %v255 = vld [vmem:[%s1 + $0x90] sm:$0xff]
        %v256 = vld [vmem:[%s1 + $0x98] sm:$0xff]
        %v257 = vld [vmem:[%s1 + $0xa0] sm:$0xff]
        %v258 = vld [vmem:[%s1 + $0xa8] sm:$0xff]
        %v259 = vld [vmem:[%s1 + $0xb0] sm:$0xff]
        %v260 = vld [vmem:[%s1 + $0xb8] sm:$0xff]
        %v261 = vld [vmem:[%s1 + $0xc0] sm:$0xff]
        %v262 = vld [vmem:[%s1 + $0xc8] sm:$0xff]
        %v263 = vld [vmem:[%s1 + $0xd0] sm:$0xff]
        %v264 = vld [vmem:[%s1 + $0xd8] sm:$0xff]
        %v265 = vld [vmem:[%s1 + $0xe0] sm:$0xff]
        %v266 = vld [vmem:[%s1 + $0xe8] sm:$0xff]
        %v267 = vld [vmem:[%s1 + $0xf0] sm:$0xff]
        %v268 = vld [vmem:[%s1 + $0xf8] sm:$0xff]
        %v269 = vld [vmem:[%s1 + $0x100] sm:$0xff]
        %v270 = vld [vmem:[%s1 + $0x108] sm:$0xff]
        %v271 = vld [vmem:[%s1 + $0x110] sm:$0xff]
        %v272 = vld [vmem:[%s1 + $0x118] sm:$0xff]
        %v273 = vld [vmem:[%s1 + $0x120] sm:$0xff]
        %v274 = vld [vmem:[%s1 + $0x128] sm:$0xff]
        %v275 = vld [vmem:[%s1 + $0x130] sm:$0xff]
        %v276 = vld [vmem:[%s1 + $0x138] sm:$0xff]
        %v277 = vld [vmem:[%s1 + $0x140] sm:$0xff]
        %v278 = vld [vmem:[%s1 + $0x148] sm:$0xff]
        %v279 = vld [vmem:[%s1 + $0x150] sm:$0xff]
        %v280 = vld [vmem:[%s1 + $0x158] sm:$0xff]
        %v281 = vld [vmem:[%s1 + $0x160] sm:$0xff]
        %v282 = vld [vmem:[%s1 + $0x168] sm:$0xff]
        %v283 = vld [vmem:[%s1 + $0x170] sm:$0xff]
        %v284 = vld [vmem:[%s1 + $0x178] sm:$0xff]
        %v285 = vld [vmem:[%s1 + $0x180] sm:$0xff]
        %v286 = vld [vmem:[%s1 + $0x188] sm:$0xff]
        %v287 = vld [vmem:[%s1 + $0x190] sm:$0xff]
        %v288 = vld [vmem:[%s1 + $0x198] sm:$0xff]
        %v289 = vld [vmem:[%s1 + $0x1a0] sm:$0xff]
        %v290 = vld [vmem:[%s1 + $0x1a8] sm:$0xff]
        %v291 = vld [vmem:[%s1 + $0x1b0] sm:$0xff]
        %v292 = vld [vmem:[%s1 + $0x1b8] sm:$0xff]
        %v293 = vld [vmem:[%s1 + $0x1c0] sm:$0xff]
        %v294 = vld [vmem:[%s1 + $0x1c8] sm:$0xff]
        %v295 = vld [vmem:[%s1 + $0x1d0] sm:$0xff]
        %v296 = vld [vmem:[%s1 + $0x1d8] sm:$0xff]
        %v297 = vld [vmem:[%s1 + $0x1e0] sm:$0xff]
        %v298 = vld [vmem:[%s1 + $0x1e8] sm:$0xff]
        %v299 = vld [vmem:[%s1 + $0x1f0] sm:$0xff]
        %v300 = vld [vmem:[%s1 + $0x1f8] sm:$0xff]
        %301 = vmatpush.msra.mxu0 %v299
        %302 = vmatpush.msra.mxu0 %v297
        %303 = vmatpush.msra.mxu0 %v295
        %304 = vmatpush.msra.mxu0 %v293
        %305 = vmatpush.msra.mxu0 %v291
        %306 = vmatpush.msra.mxu0 %v289
        %307 = vmatpush.msra.mxu0 %v287
        %308 = vmatpush.msra.mxu0 %v285
        %309 = vmatpush.msra.mxu0 %v283
        %310 = vmatpush.msra.mxu0 %v281
        %311 = vmatpush.msra.mxu0 %v279
        %312 = vmatpush.msra.mxu0 %v277
        %313 = vmatpush.msra.mxu0 %v275
        %314 = vmatpush.msra.mxu0 %v273
        %315 = vmatpush.msra.mxu0 %v271
        %316 = vmatpush.msra.mxu0 %v269
        %317 = vmatmul.f32.gmra.mxu0 %v221
        %v318 = vpop.f32.mrf.mxu0
        %v319 = vadd.f32 0.0, %v318
        %320 = vmatmul.f32.gmra.mxu0 %v222
        %v321 = vpop.f32.mrf.mxu0
        %v322 = vadd.f32 0.0, %v321
        %323 = vmatmul.f32.gmra.mxu0 %v223
        %v324 = vpop.f32.mrf.mxu0
        %v325 = vadd.f32 0.0, %v324
        %326 = vmatmul.f32.gmra.mxu0 %v224
        %v327 = vpop.f32.mrf.mxu0
        %v328 = vadd.f32 0.0, %v327
        %329 = vmatmul.f32.gmra.mxu0 %v225
        %v330 = vpop.f32.mrf.mxu0
        %v331 = vadd.f32 0.0, %v330
        %332 = vmatmul.f32.gmra.mxu0 %v226
        %v333 = vpop.f32.mrf.mxu0
        %v334 = vadd.f32 0.0, %v333
        %335 = vmatmul.f32.gmra.mxu0 %v227
        %v336 = vpop.f32.mrf.mxu0
        %v337 = vadd.f32 0.0, %v336
        %338 = vmatmul.f32.gmra.mxu0 %v228
        %v339 = vpop.f32.mrf.mxu0
        %v340 = vadd.f32 0.0, %v339
        %341 = vmatmul.f32.gmra.mxu0 %v229
        %v342 = vpop.f32.mrf.mxu0
        %v343 = vadd.f32 0.0, %v342
        %344 = vmatmul.f32.gmra.mxu0 %v230
        %v345 = vpop.f32.mrf.mxu0
        %v346 = vadd.f32 0.0, %v345
        %347 = vmatmul.f32.gmra.mxu0 %v231
        %v348 = vpop.f32.mrf.mxu0
        %v349 = vadd.f32 0.0, %v348
        %350 = vmatmul.f32.gmra.mxu0 %v232
        %v351 = vpop.f32.mrf.mxu0
        %v352 = vadd.f32 0.0, %v351
        %353 = vmatmul.f32.gmra.mxu0 %v233
        %v354 = vpop.f32.mrf.mxu0
        %v355 = vadd.f32 0.0, %v354
        %356 = vmatmul.f32.gmra.mxu0 %v234
        %v357 = vpop.f32.mrf.mxu0
        %v358 = vadd.f32 0.0, %v357
        %359 = vmatmul.f32.gmra.mxu0 %v235
        %v360 = vpop.f32.mrf.mxu0
        %v361 = vadd.f32 0.0, %v360
        %362 = vmatmul.f32.gmra.mxu0 %v236
        %v363 = vpop.f32.mrf.mxu0
        %v364 = vadd.f32 0.0, %v363
        %365 = vdwg.mxu0
        %366 = vmatpush.msra.mxu0 %v300
        %367 = vmatpush.msra.mxu0 %v298
        %368 = vmatpush.msra.mxu0 %v296
        %369 = vmatpush.msra.mxu0 %v294
        %370 = vmatpush.msra.mxu0 %v292
        %371 = vmatpush.msra.mxu0 %v290
        %372 = vmatpush.msra.mxu0 %v288
        %373 = vmatpush.msra.mxu0 %v286
        %374 = vmatpush.msra.mxu0 %v284
        %375 = vmatpush.msra.mxu0 %v282
        %376 = vmatpush.msra.mxu0 %v280
        %377 = vmatpush.msra.mxu0 %v278
        %378 = vmatpush.msra.mxu0 %v276
        %379 = vmatpush.msra.mxu0 %v274
        %380 = vmatpush.msra.mxu0 %v272
        %381 = vmatpush.msra.mxu0 %v270
        %382 = vmatmul.f32.gmra.mxu0 %v221
        %v383 = vpop.f32.mrf.mxu0
        %v384 = vadd.f32 0.0, %v383
        %385 = vmatmul.f32.gmra.mxu0 %v222
        %v386 = vpop.f32.mrf.mxu0
        %v387 = vadd.f32 0.0, %v386
        %388 = vmatmul.f32.gmra.mxu0 %v223
        %v389 = vpop.f32.mrf.mxu0
        %v390 = vadd.f32 0.0, %v389
        %391 = vmatmul.f32.gmra.mxu0 %v224
        %v392 = vpop.f32.mrf.mxu0
        %v393 = vadd.f32 0.0, %v392
        %394 = vmatmul.f32.gmra.mxu0 %v225
        %v395 = vpop.f32.mrf.mxu0
        %v396 = vadd.f32 0.0, %v395
        %397 = vmatmul.f32.gmra.mxu0 %v226
        %v398 = vpop.f32.mrf.mxu0
        %v399 = vadd.f32 0.0, %v398
        %400 = vmatmul.f32.gmra.mxu0 %v227
        %v401 = vpop.f32.mrf.mxu0
        %v402 = vadd.f32 0.0, %v401
        %403 = vmatmul.f32.gmra.mxu0 %v228
        %v404 = vpop.f32.mrf.mxu0
        %v405 = vadd.f32 0.0, %v404
        %406 = vmatmul.f32.gmra.mxu0 %v229
        %v407 = vpop.f32.mrf.mxu0
        %v408 = vadd.f32 0.0, %v407
        %409 = vmatmul.f32.gmra.mxu0 %v230
        %v410 = vpop.f32.mrf.mxu0
        %v411 = vadd.f32 0.0, %v410
        %412 = vmatmul.f32.gmra.mxu0 %v231
        %v413 = vpop.f32.mrf.mxu0
        %v414 = vadd.f32 0.0, %v413
        %415 = vmatmul.f32.gmra.mxu0 %v232
        %v416 = vpop.f32.mrf.mxu0
        %v417 = vadd.f32 0.0, %v416
        %418 = vmatmul.f32.gmra.mxu0 %v233
        %v419 = vpop.f32.mrf.mxu0
        %v420 = vadd.f32 0.0, %v419
        %421 = vmatmul.f32.gmra.mxu0 %v234
        %v422 = vpop.f32.mrf.mxu0
        %v423 = vadd.f32 0.0, %v422
        %424 = vmatmul.f32.gmra.mxu0 %v235
        %v425 = vpop.f32.mrf.mxu0
        %v426 = vadd.f32 0.0, %v425
        %427 = vmatmul.f32.gmra.mxu0 %v236
        %v428 = vpop.f32.mrf.mxu0
        %v429 = vadd.f32 0.0, %v428
        %430 = vdwg.mxu0
        %431 = vmatpush.msra.mxu0 %v267
        %432 = vmatpush.msra.mxu0 %v265
        %433 = vmatpush.msra.mxu0 %v263
        %434 = vmatpush.msra.mxu0 %v261
        %435 = vmatpush.msra.mxu0 %v259
        %436 = vmatpush.msra.mxu0 %v257
        %437 = vmatpush.msra.mxu0 %v255
        %438 = vmatpush.msra.mxu0 %v253
        %439 = vmatpush.msra.mxu0 %v251
        %440 = vmatpush.msra.mxu0 %v249
        %441 = vmatpush.msra.mxu0 %v247
        %442 = vmatpush.msra.mxu0 %v245
        %443 = vmatpush.msra.mxu0 %v243
        %444 = vmatpush.msra.mxu0 %v241
        %445 = vmatpush.msra.mxu0 %v239
        %446 = vmatpush.msra.mxu0 %v237
        %447 = vmatmul.f32.gmra.mxu0 %v203
        %v448 = vpop.f32.mrf.mxu0
        %v449 = vadd.f32 %v319, %v448
        %450 = vmatmul.f32.gmra.mxu0 %v204
        %v451 = vpop.f32.mrf.mxu0
        %v452 = vadd.f32 %v322, %v451
        %453 = vmatmul.f32.gmra.mxu0 %v205
        %v454 = vpop.f32.mrf.mxu0
        %v455 = vadd.f32 %v325, %v454
        %456 = vmatmul.f32.gmra.mxu0 %v206
        %v457 = vpop.f32.mrf.mxu0
        %v458 = vadd.f32 %v328, %v457
        %459 = vmatmul.f32.gmra.mxu0 %v207
        %v460 = vpop.f32.mrf.mxu0
        %v461 = vadd.f32 %v331, %v460
        %462 = vmatmul.f32.gmra.mxu0 %v208
        %v463 = vpop.f32.mrf.mxu0
        %v464 = vadd.f32 %v334, %v463
        %465 = vmatmul.f32.gmra.mxu0 %v209
        %v466 = vpop.f32.mrf.mxu0
        %v467 = vadd.f32 %v337, %v466
        %468 = vmatmul.f32.gmra.mxu0 %v210
        %v469 = vpop.f32.mrf.mxu0
        %v470 = vadd.f32 %v340, %v469
        %471 = vmatmul.f32.gmra.mxu0 %v211
        %v472 = vpop.f32.mrf.mxu0
        %v473 = vadd.f32 %v343, %v472
        %474 = vmatmul.f32.gmra.mxu0 %v212
        %v475 = vpop.f32.mrf.mxu0
        %v476 = vadd.f32 %v346, %v475
        %477 = vmatmul.f32.gmra.mxu0 %v213
        %v478 = vpop.f32.mrf.mxu0
        %v479 = vadd.f32 %v349, %v478
        %480 = vmatmul.f32.gmra.mxu0 %v214
        %v481 = vpop.f32.mrf.mxu0
        %v482 = vadd.f32 %v352, %v481
        %483 = vmatmul.f32.gmra.mxu0 %v215
        %v484 = vpop.f32.mrf.mxu0
        %v485 = vadd.f32 %v355, %v484
        %486 = vmatmul.f32.gmra.mxu0 %v216
        %v487 = vpop.f32.mrf.mxu0
        %v488 = vadd.f32 %v358, %v487
        %489 = vmatmul.f32.gmra.mxu0 %v217
        %v490 = vpop.f32.mrf.mxu0
        %v491 = vadd.f32 %v361, %v490
        %492 = vmatmul.f32.gmra.mxu0 %v218
        %v493 = vpop.f32.mrf.mxu0
        %v494 = vadd.f32 %v364, %v493
        %495 = vdwg.mxu0
        %496 = vmatpush.msra.mxu0 %v268
        %497 = vmatpush.msra.mxu0 %v266
        %498 = vmatpush.msra.mxu0 %v264
        %499 = vmatpush.msra.mxu0 %v262
        %500 = vmatpush.msra.mxu0 %v260
        %501 = vmatpush.msra.mxu0 %v258
        %502 = vmatpush.msra.mxu0 %v256
        %503 = vmatpush.msra.mxu0 %v254
        %504 = vmatpush.msra.mxu0 %v252
        %505 = vmatpush.msra.mxu0 %v250
        %506 = vmatpush.msra.mxu0 %v248
        %507 = vmatpush.msra.mxu0 %v246
        %508 = vmatpush.msra.mxu0 %v244
        %509 = vmatpush.msra.mxu0 %v242
        %510 = vmatpush.msra.mxu0 %v240
        %511 = vmatpush.msra.mxu0 %v238
        %512 = vmatmul.f32.gmra.mxu0 %v203
        %v513 = vpop.f32.mrf.mxu0
        %v514 = vadd.f32 %v384, %v513
        %515 = vmatmul.f32.gmra.mxu0 %v204
        %v516 = vpop.f32.mrf.mxu0
        %v517 = vadd.f32 %v387, %v516
        %518 = vmatmul.f32.gmra.mxu0 %v205
        %v519 = vpop.f32.mrf.mxu0
        %v520 = vadd.f32 %v390, %v519
        %521 = vmatmul.f32.gmra.mxu0 %v206
        %v522 = vpop.f32.mrf.mxu0
        %v523 = vadd.f32 %v393, %v522
        %524 = vmatmul.f32.gmra.mxu0 %v207
        %v525 = vpop.f32.mrf.mxu0
        %v526 = vadd.f32 %v396, %v525
        %527 = vmatmul.f32.gmra.mxu0 %v208
        %v528 = vpop.f32.mrf.mxu0
        %v529 = vadd.f32 %v399, %v528
        %530 = vmatmul.f32.gmra.mxu0 %v209
        %v531 = vpop.f32.mrf.mxu0
        %v532 = vadd.f32 %v402, %v531
        %533 = vmatmul.f32.gmra.mxu0 %v210
        %v534 = vpop.f32.mrf.mxu0
        %v535 = vadd.f32 %v405, %v534
        %536 = vmatmul.f32.gmra.mxu0 %v211
        %v537 = vpop.f32.mrf.mxu0
        %v538 = vadd.f32 %v408, %v537
        %539 = vmatmul.f32.gmra.mxu0 %v212
        %v540 = vpop.f32.mrf.mxu0
        %v541 = vadd.f32 %v411, %v540
        %542 = vmatmul.f32.gmra.mxu0 %v213
        %v543 = vpop.f32.mrf.mxu0
        %v544 = vadd.f32 %v414, %v543
        %545 = vmatmul.f32.gmra.mxu0 %v214
        %v546 = vpop.f32.mrf.mxu0
        %v547 = vadd.f32 %v417, %v546
        %548 = vmatmul.f32.gmra.mxu0 %v215
        %v549 = vpop.f32.mrf.mxu0
        %v550 = vadd.f32 %v420, %v549
        %551 = vmatmul.f32.gmra.mxu0 %v216
        %v552 = vpop.f32.mrf.mxu0
        %v553 = vadd.f32 %v423, %v552
        %554 = vmatmul.f32.gmra.mxu0 %v217
        %v555 = vpop.f32.mrf.mxu0
        %v556 = vadd.f32 %v426, %v555
        %557 = vmatmul.f32.gmra.mxu0 %v218
        %v558 = vpop.f32.mrf.mxu0
        %v559 = vadd.f32 %v429, %v558
        %560 = vdwg.mxu0
        %v561 = vmul.f32 %v449, %v449
        %v562 = vmul.f32 %v452, %v452
        %v563 = vmul.f32 %v455, %v455
        %v564 = vmul.f32 %v458, %v458
        %v565 = vmul.f32 %v461, %v461
        %v566 = vmul.f32 %v464, %v464
        %v567 = vmul.f32 %v467, %v467
        %v568 = vmul.f32 %v470, %v470
        %v569 = vmul.f32 %v473, %v473
        %v570 = vmul.f32 %v476, %v476
        %v571 = vmul.f32 %v479, %v479
        %v572 = vmul.f32 %v482, %v482
        %v573 = vmul.f32 %v485, %v485
        %v574 = vmul.f32 %v488, %v488
        %v575 = vmul.f32 %v491, %v491
        %v576 = vmul.f32 %v494, %v494
        %v577 = vmul.f32 %v514, %v514
        %v578 = vmul.f32 %v517, %v517
        %v579 = vmul.f32 %v520, %v520
        %v580 = vmul.f32 %v523, %v523
        %v581 = vmul.f32 %v526, %v526
        %v582 = vmul.f32 %v529, %v529
        %v583 = vmul.f32 %v532, %v532
        %v584 = vmul.f32 %v535, %v535
        %v585 = vmul.f32 %v538, %v538
        %v586 = vmul.f32 %v541, %v541
        %v587 = vmul.f32 %v544, %v544
        %v588 = vmul.f32 %v547, %v547
        %v589 = vmul.f32 %v550, %v550
        %v590 = vmul.f32 %v553, %v553
        %v591 = vmul.f32 %v556, %v556
        %v592 = vmul.f32 %v559, %v559
        %v593 = vadd.f32 %v561, %v577
        %v594 = vadd.f32 %v562, %v578
        %v595 = vadd.f32 %v563, %v579
        %v596 = vadd.f32 %v564, %v580
        %v597 = vadd.f32 %v565, %v581
        %v598 = vadd.f32 %v566, %v582
        %v599 = vadd.f32 %v567, %v583
        %v600 = vadd.f32 %v568, %v584
        %v601 = vadd.f32 %v569, %v585
        %v602 = vadd.f32 %v570, %v586
        %v603 = vadd.f32 %v571, %v587
        %v604 = vadd.f32 %v572, %v588
        %v605 = vadd.f32 %v573, %v589
        %v606 = vadd.f32 %v574, %v590
        %v607 = vadd.f32 %v575, %v591
        %v608 = vadd.f32 %v576, %v592
        %v609 = vld [vmem:[#allocation2] sm:$0xff]
        %v610 = vld [vmem:[#allocation2 + $0x8] sm:$0xff]
        %v611 = vld [vmem:[#allocation2 + $0x10] sm:$0xff]
        %v612 = vld [vmem:[#allocation2 + $0x18] sm:$0xff]
        %v613 = vld [vmem:[#allocation2 + $0x20] sm:$0xff]
        %v614 = vld [vmem:[#allocation2 + $0x28] sm:$0xff]
        %v615 = vld [vmem:[#allocation2 + $0x30] sm:$0xff]
        %v616 = vld [vmem:[#allocation2 + $0x38] sm:$0xff]
        %v617 = vld [vmem:[#allocation2 + $0x40] sm:$0xff]
        %v618 = vld [vmem:[#allocation2 + $0x48] sm:$0xff]
        %v619 = vld [vmem:[#allocation2 + $0x50] sm:$0xff]
        %v620 = vld [vmem:[#allocation2 + $0x58] sm:$0xff]
        %v621 = vld [vmem:[#allocation2 + $0x60] sm:$0xff]
        %v622 = vld [vmem:[#allocation2 + $0x68] sm:$0xff]
        %v623 = vld [vmem:[#allocation2 + $0x70] sm:$0xff]
        %v624 = vld [vmem:[#allocation2 + $0x78] sm:$0xff]
        %625 = vmatpush.msra.mxu0 %v624
        %626 = vmatpush.msra.mxu0 %v623
        %627 = vmatpush.msra.mxu0 %v622
        %628 = vmatpush.msra.mxu0 %v621
        %629 = vmatpush.msra.mxu0 %v620
        %630 = vmatpush.msra.mxu0 %v619
        %631 = vmatpush.msra.mxu0 %v618
        %632 = vmatpush.msra.mxu0 %v617
        %633 = vmatpush.msra.mxu0 %v616
        %634 = vmatpush.msra.mxu0 %v615
        %635 = vmatpush.msra.mxu0 %v614
        %636 = vmatpush.msra.mxu0 %v613
        %637 = vmatpush.msra.mxu0 %v612
        %638 = vmatpush.msra.mxu0 %v611
        %639 = vmatpush.msra.mxu0 %v610
        %640 = vmatpush.msra.mxu0 %v609
        %641 = vmatmul.f32.gmra.mxu0 %v593
        %v642 = vpop.f32.mrf.mxu0
        %v643 = vadd.f32 1e-09, %v642
        %644 = vmatmul.f32.gmra.mxu0 %v594
        %v645 = vpop.f32.mrf.mxu0
        %v646 = vadd.f32 1e-09, %v645
        %647 = vmatmul.f32.gmra.mxu0 %v595
        %v648 = vpop.f32.mrf.mxu0
        %v649 = vadd.f32 1e-09, %v648
        %650 = vmatmul.f32.gmra.mxu0 %v596
        %v651 = vpop.f32.mrf.mxu0
        %v652 = vadd.f32 1e-09, %v651
        %653 = vmatmul.f32.gmra.mxu0 %v597
        %v654 = vpop.f32.mrf.mxu0
        %v655 = vadd.f32 1e-09, %v654
        %656 = vmatmul.f32.gmra.mxu0 %v598
        %v657 = vpop.f32.mrf.mxu0
        %v658 = vadd.f32 1e-09, %v657
        %659 = vmatmul.f32.gmra.mxu0 %v599
        %v660 = vpop.f32.mrf.mxu0
        %v661 = vadd.f32 1e-09, %v660
        %662 = vmatmul.f32.gmra.mxu0 %v600
        %v663 = vpop.f32.mrf.mxu0
        %v664 = vadd.f32 1e-09, %v663
        %665 = vmatmul.f32.gmra.mxu0 %v601
        %v666 = vpop.f32.mrf.mxu0
        %v667 = vadd.f32 1e-09, %v666
        %668 = vmatmul.f32.gmra.mxu0 %v602
        %v669 = vpop.f32.mrf.mxu0
        %v670 = vadd.f32 1e-09, %v669
        %671 = vmatmul.f32.gmra.mxu0 %v603
        %v672 = vpop.f32.mrf.mxu0
        %v673 = vadd.f32 1e-09, %v672
        %674 = vmatmul.f32.gmra.mxu0 %v604
        %v675 = vpop.f32.mrf.mxu0
        %v676 = vadd.f32 1e-09, %v675
        %677 = vmatmul.f32.gmra.mxu0 %v605
        %v678 = vpop.f32.mrf.mxu0
        %v679 = vadd.f32 1e-09, %v678
        %680 = vmatmul.f32.gmra.mxu0 %v606
        %v681 = vpop.f32.mrf.mxu0
        %v682 = vadd.f32 1e-09, %v681
        %683 = vmatmul.f32.gmra.mxu0 %v607
        %v684 = vpop.f32.mrf.mxu0
        %v685 = vadd.f32 1e-09, %v684
        %686 = vmatmul.f32.gmra.mxu0 %v608
        %v687 = vpop.f32.mrf.mxu0
        %v688 = vadd.f32 1e-09, %v687
        %689 = vdwg.mxu0
        %v690 = vlog2.pop %v643
        %v691 = vmul.f32 %v690, 0.6931472
        %v692 = vlog2.pop %v646
        %v693 = vmul.f32 %v692, 0.6931472
        %v694 = vlog2.pop %v649
        %v695 = vmul.f32 %v694, 0.6931472
        %v696 = vlog2.pop %v652
        %v697 = vmul.f32 %v696, 0.6931472
        %v698 = vlog2.pop %v655
        %v699 = vmul.f32 %v698, 0.6931472
        %v700 = vlog2.pop %v658
        %v701 = vmul.f32 %v700, 0.6931472
        %v702 = vlog2.pop %v661
        %v703 = vmul.f32 %v702, 0.6931472
        %v704 = vlog2.pop %v664
        %v705 = vmul.f32 %v704, 0.6931472
        %v706 = vlog2.pop %v667
        %v707 = vmul.f32 %v706, 0.6931472
        %v708 = vlog2.pop %v670
        %v709 = vmul.f32 %v708, 0.6931472
        %v710 = vlog2.pop %v673
        %v711 = vmul.f32 %v710, 0.6931472
        %v712 = vlog2.pop %v676
        %v713 = vmul.f32 %v712, 0.6931472
        %v714 = vlog2.pop %v679
        %v715 = vmul.f32 %v714, 0.6931472
        %v716 = vlog2.pop %v682
        %v717 = vmul.f32 %v716, 0.6931472
        %v718 = vlog2.pop %v685
        %v719 = vmul.f32 %v718, 0.6931472
        %v720 = vlog2.pop %v688
        %v721 = vmul.f32 %v720, 0.6931472
        %v722 = vmul.f32 %v691, 0.25
        %v723 = vmul.f32 %v693, 0.25
        %v724 = vmul.f32 %v695, 0.25
        %v725 = vmul.f32 %v697, 0.25
        %v726 = vmul.f32 %v699, 0.25
        %v727 = vmul.f32 %v701, 0.25
        %v728 = vmul.f32 %v703, 0.25
        %v729 = vmul.f32 %v705, 0.25
        %v730 = vmul.f32 %v707, 0.25
        %v731 = vmul.f32 %v709, 0.25
        %v732 = vmul.f32 %v711, 0.25
        %v733 = vmul.f32 %v713, 0.25
        %v734 = vmul.f32 %v715, 0.25
        %v735 = vmul.f32 %v717, 0.25
        %v736 = vmul.f32 %v719, 0.25
        %v737 = vmul.f32 %v721, 0.25
        %v738 = vadd.f32 %v722, 1.25
        %v739 = vadd.f32 %v723, 1.25
        %v740 = vadd.f32 %v724, 1.25
        %v741 = vadd.f32 %v725, 1.25
        %v742 = vadd.f32 %v726, 1.25
        %v743 = vadd.f32 %v727, 1.25
        %v744 = vadd.f32 %v728, 1.25
        %v745 = vadd.f32 %v729, 1.25
        %v746 = vadd.f32 %v730, 1.25
        %v747 = vadd.f32 %v731, 1.25
        %v748 = vadd.f32 %v732, 1.25
        %v749 = vadd.f32 %v733, 1.25
        %v750 = vadd.f32 %v734, 1.25
        %v751 = vadd.f32 %v735, 1.25
        %v752 = vadd.f32 %v736, 1.25
        %v753 = vadd.f32 %v737, 1.25
        %754 = vst [vmem:[%s194] sm:$0xff] %v738
        %755 = vst [vmem:[%s194 + $0x8] sm:$0xff] %v739
        %756 = vst [vmem:[%s194 + $0x10] sm:$0xff] %v740
        %757 = vst [vmem:[%s194 + $0x18] sm:$0xff] %v741
        %758 = vst [vmem:[%s194 + $0x20] sm:$0xff] %v742
        %759 = vst [vmem:[%s194 + $0x28] sm:$0xff] %v743
        %760 = vst [vmem:[%s194 + $0x30] sm:$0xff] %v744
        %761 = vst [vmem:[%s194 + $0x38] sm:$0xff] %v745
        %762 = vst [vmem:[%s194 + $0x40] sm:$0xff] %v746
        %763 = vst [vmem:[%s194 + $0x48] sm:$0xff] %v747
        %764 = vst [vmem:[%s194 + $0x50] sm:$0xff] %v748
        %765 = vst [vmem:[%s194 + $0x58] sm:$0xff] %v749
        %766 = vst [vmem:[%s194 + $0x60] sm:$0xff] %v750
        %767 = vst [vmem:[%s194 + $0x68] sm:$0xff] %v751
        %768 = vst [vmem:[%s194 + $0x70] sm:$0xff] %v752
        %769 = vst [vmem:[%s194 + $0x78] sm:$0xff] %v753
        %s770 = sand.u32 %s108, 1
        %s771 = scalar_lea.sflag [#allocation4], %s770
        %s772 = sand.u32 %s108, 1
        %s773 = smul.addr %s772, 128
        %s774 = scalar_lea.vmem [#allocation5], %s773
        // Predicated region
        $region37: #{tpu_custom_call.1} parent=31 // pred_check
          %p775 = pneg %p118
        $region38: #{tpu_custom_call.1} parent=31 // pred_check_branch
          %777 = sbr.rel (%p775) target = $region40
        $region39: #{tpu_custom_call.1} parent=31 // pred_region
          %s778 = smul.u32 16, %s23
          %780 = vsyncadd %s771, 0
          %s781 = smul.addr %s22, 16
          %s782 = sadd.s32 %s778, %s781
          %s783 = smul.addr %s782, 8
          %s784 = scalar_lea.hbm %s3, %s783
          %s785 = sshll.u32 %s774, 4
          %s786 = int_to_ptr.vmem [resolvable:$true] %s785
          %s787 = sshll.u32 %s784, 4
          %s788 = int_to_ptr.hbm [resolvable:$true] %s787
          %793 = dma.vmem_to_hbm [thread:$0]  %s786, 2048, %s788, %s771, 128, 128, 8
        $region40: #{tpu_custom_call.1} parent=31 // pred_fallthru
          _
      $region32: #{tpu_custom_call.1} parent=5 // pred_fallthru
        _
      %p794 = scmp.le.s32.totalorder 2, %s13
      // Predicated region
      $region41: #{tpu_custom_call.1} parent=5 // pred_check
        %p795 = pneg %p794
      $region42: #{tpu_custom_call.1} parent=5 // pred_check_branch
        %797 = sbr.rel (%p795) target = $region44
      $region43: #{tpu_custom_call.1} parent=5 // pred_region
        %s798 = ssub.s32 %s13, 2
        // Predicated region
        $region45: #{tpu_custom_call.1} parent=43 // pred_check
          %p799 = pneg %p124
        $region46: #{tpu_custom_call.1} parent=43 // pred_check_branch
          %801 = sbr.rel (%p799) target = $region48
        $region47: #{tpu_custom_call.1} parent=43 // pred_region
          %s802 = sand.u32 %s109, 1
          %s803 = scalar_lea.sflag [#allocation4], %s802
          %s804 = sand.u32 %s109, 1
          %s805 = smul.addr %s804, 128
          %s806 = scalar_lea.vmem [#allocation5], %s805
          %808 = dma.done %s803, 2048
        $region48: #{tpu_custom_call.1} parent=43 // pred_fallthru
          _
      $region44: #{tpu_custom_call.1} parent=5 // pred_fallthru
        _
    $region6: #{tpu_custom_call.1} parent=1 // loop_footer
      %s17 = sadd.s32 1, %s13
    $region7: #{tpu_custom_call.1} parent=1 // loop_footer_branch
      %12 = sbr.rel target = $region3
    $region8: #{tpu_custom_call.1} parent=1 // loop_exit
      _
    %809 = vsyncpa [#allocation3], 1
    %s810 = scalar_lea.sflag [#allocation3], 1
    %811 = vsyncpa %s810, 1
    %812 = vsyncpa [#allocation4], 1
    %s813 = scalar_lea.sflag [#allocation4], 1
    %814 = vsyncpa %s813, 1

</llo_original>
